<compile_context>
chip_gen: v7x
topology: tpu7x:2x2x1
jax: 0.10.0
libtpu: 0.0.40
codegen_flags: <defaults>
</compile_context>

<pallas_src>
import functools

import numpy as np

import jax
import jax.numpy as jnp
from jax.experimental import pallas as pl
from jax.experimental.pallas import tpu as pltpu

FILT = 3                 # conv1 filter size (3x3)
N_TAPS = FILT * FILT     # 9
N_CH = 4                 # conv1 out channels == conv2 in channels


def _round_up(x, m):
    return (x + m - 1) // m * m


def _fused_kernel(a_ref, weff_ref, beff_ref, w1_ref, b1_ref, w2_ref, b2_ref, o_ref):
    """One batch tile of the whole network.

    a_ref    : (N_TAPS, TB, Ppad) f32 VMEM  im2col taps, pixels lane-dense (zero padded)
    weff_ref : (Ppad, NQpad)      f32 VMEM  Linear weight with the triu scatter folded in (resident)
    beff_ref : (1, NQpad)         f32 VMEM  matching bias (resident)
    w1_ref   : (N_CH*N_TAPS,)     f32 SMEM  conv1 weights, index N_TAPS*c + k  (k = 3*dh + dw)
    b1_ref   : (N_CH,)            f32 SMEM  conv1 bias
    w2_ref   : (N_CH,)            f32 SMEM  conv2 (1x1) weights
    b2_ref   : (1,)               f32 SMEM  conv2 bias
    o_ref    : (TB, NQpad)        f32 VMEM  flattened (padded) symmetric output matrices
    """
    tb, ppad = a_ref.shape[1], a_ref.shape[2]
    zero = jnp.zeros((tb, ppad), jnp.float32)

    # conv2(relu(conv1(x))) fused per output pixel, on the VPU (all f32).
    z = zero + b2_ref[0]
    for c in range(N_CH):
        h = zero + b1_ref[c]
        for k in range(N_TAPS):
            h = h + a_ref[k] * w1_ref[N_TAPS * c + k]
        z = z + jnp.maximum(h, 0.0) * w2_ref[c]

    # Linear + symmetric triu scatter as one lane-dense MXU matmul.
    y = jnp.dot(z, weff_ref[...], preferred_element_type=jnp.float32) + beff_ref[...]
    o_ref[...] = y.astype(o_ref.dtype)


@functools.partial(jax.jit, static_argnames=("output_size",))
def simple_conv_only_net_forward(x, conv1_w, conv1_b, conv2_w, conv2_b, out_w, out_b,
                                 *, output_size):
    """x: (B, 1, H, W) float32.  Returns (B, 1, N, N), matching SimpleConvOnlyNet.forward."""
    n0, n1 = output_size
    assert n0 == n1, "symmetric triu scatter (as in the torch module) requires a square output"
    assert (n0 * n1 + n0) % 2 == 0
    B, C, H, W = x.shape
    assert C == 1
    hp, wp = H - FILT + 1, W - FILT + 1
    P = hp * wp                       # == linear_size in the torch module
    NQ = n0 * n1
    n_tri = (n0 * n1 + n0) // 2

    x = x.astype(jnp.float32)

    # --- im2col (layout plumbing): 9 taps -> lane-dense (B, P) pixel slabs -------------------
    img = x[:, 0]                                                    # (B, H, W)
    taps = [img[:, dh:dh + hp, dw:dw + wp].reshape(B, P)
            for dh in range(FILT) for dw in range(FILT)]             # tap index k = 3*dh + dw
    a = jnp.stack(taps, axis=0)                                      # (N_TAPS, B, P)

    # --- lane/sublane friendly padding ---------------------------------------------------------
    Ppad = _round_up(P, 128)
    NQpad = _round_up(NQ, 128)

    # Batch tile: multiple of 8 sublanes; capped so double-buffered tiles + live VPU values fit
    # comfortably inside the scoped-VMEM defaults of every generation (16 MiB v5e, 32 MiB v6e/v7x).
    bytes_per_row = (N_TAPS * Ppad + NQpad) * 4
    budget = 12 * 1024 * 1024
    TB = max(8, min(128, (budget // (2 * bytes_per_row)) // 8 * 8))
    TB = min(TB, _round_up(B, 8))                                    # don't over-pad tiny batches
    Bpad = _round_up(B, TB)

    a = jnp.pad(a, ((0, 0), (0, Bpad - B), (0, Ppad - P)))

    # --- conv params -> SMEM scalar tables ------------------------------------------------------
    w1_flat = conv1_w.reshape(N_CH, N_TAPS).reshape(-1).astype(jnp.float32)   # [N_TAPS*c + k]
    b1v = conv1_b.reshape(-1).astype(jnp.float32)                             # (4,)
    w2v = conv2_w.reshape(-1).astype(jnp.float32)                             # (4,)
    b2v = conv2_b.reshape(-1).astype(jnp.float32)                             # (1,)

    # --- fold Linear + symmetric triu scatter into one lane-dense weight ------------------------
    ti, tj = np.triu_indices(n0)
    tmat = np.zeros((n0, n0), dtype=np.int32)
    tmat[ti, tj] = np.arange(n_tri)
    tmat[tj, ti] = np.arange(n_tri)
    t_idx = tmat.reshape(-1)                                          # (NQ,), values in [0, n_tri)
    weff = jnp.take(out_w.T.astype(jnp.float32), t_idx, axis=1)       # (P, NQ)
    beff = jnp.take(out_b.astype(jnp.float32), t_idx).reshape(1, NQ)  # (1, NQ)
    weff = jnp.pad(weff, ((0, Ppad - P), (0, NQpad - NQ)))
    beff = jnp.pad(beff, ((0, 0), (0, NQpad - NQ)))

    grid = (Bpad // TB,)
    smem = pltpu.MemorySpace.SMEM

    flops = Bpad * Ppad * (N_CH * (2 * N_TAPS + 3) + 2) + 2 * Bpad * Ppad * NQpad
    bytes_accessed = 4 * (N_TAPS * Bpad * Ppad + Ppad * NQpad + NQpad
                          + Bpad * NQpad + N_CH * N_TAPS + 2 * N_CH + 1)

    out = pl.pallas_call(
        _fused_kernel,
        out_shape=jax.ShapeDtypeStruct((Bpad, NQpad), jnp.float32),
        grid=grid,
        in_specs=[
            pl.BlockSpec((N_TAPS, TB, Ppad), lambda b: (0, b, 0)),    # batch-tiled patch taps
            pl.BlockSpec((Ppad, NQpad), lambda b: (0, 0)),            # resident fused weight
            pl.BlockSpec((1, NQpad), lambda b: (0, 0)),               # resident fused bias
            pl.BlockSpec(memory_space=smem),                          # conv1 weights
            pl.BlockSpec(memory_space=smem),                          # conv1 bias
            pl.BlockSpec(memory_space=smem),                          # conv2 weights
            pl.BlockSpec(memory_space=smem),                          # conv2 bias
        ],
        out_specs=pl.BlockSpec((TB, NQpad), lambda b: (b, 0)),        # lane-dense (128) stores
        compiler_params=pltpu.CompilerParams(
            dimension_semantics=("parallel",),                        # shards batch over TCs on v7x
            vmem_limit_bytes=32 * 1024 * 1024,
        ),
        cost_estimate=pl.CostEstimate(
            flops=flops, transcendentals=0, bytes_accessed=bytes_accessed),
    )(a, weff, beff, w1_flat, b1v, w2v, b2v)

    return out[:B, :NQ].reshape(B, 1, n0, n1)


def _reference_forward(x, conv1_w, conv1_b, conv2_w, conv2_b, out_w, out_b, output_size):
    """Pure JAX/numpy reference mirroring the PyTorch forward exactly."""
    dn = ("NCHW", "OIHW", "NCHW")
    h = jax.lax.conv_general_dilated(x, conv1_w, (1, 1), "VALID", dimension_numbers=dn)
    h = jnp.maximum(h + conv1_b.reshape(1, -1, 1, 1), 0.0)
    g = jax.lax.conv_general_dilated(h, conv2_w, (1, 1), "VALID", dimension_numbers=dn)
    g = g + conv2_b.reshape(1, -1, 1, 1)
    B = x.shape[0]
    lin = np.asarray(g.reshape(B, -1) @ out_w.T + out_b)
    n0, n1 = output_size
    ti, tj = np.triu_indices(n0)
    y = np.zeros((B, 1, n0, n1), np.float32)
    for i in range(B):
        y[i, 0][ti, tj] = lin[i]
        y[i, 0][tj, ti] = lin[i]
    return y


if __name__ == "__main__":
    input_size = (16, 16)     # H, W of the single-channel input image
    output_size = (4, 4)      # square => (O0*O1 + O0)//2 == number of triu entries
    batch = 2

    hp, wp = input_size[0] - FILT + 1, input_size[1] - FILT + 1
    linear_size = hp * wp
    n_tri = (output_size[0] * output_size[1] + output_size[0]) // 2

    key = jax.random.PRNGKey(0)
    ks = jax.random.split(key, 7)
    x = jax.random.normal(ks[0], (batch, 1) + input_size, jnp.float32)

    # PyTorch-default-style uniform init (bound = 1/sqrt(fan_in)), deterministic.
    bc1 = 1.0 / (1 * FILT * FILT) ** 0.5
    conv1_w = jax.random.uniform(ks[1], (N_CH, 1, FILT, FILT), jnp.float32, -bc1, bc1)
    conv1_b = jax.random.uniform(ks[2], (N_CH,), jnp.float32, -bc1, bc1)
    bc2 = 1.0 / N_CH ** 0.5
    conv2_w = jax.random.uniform(ks[3], (1, N_CH, 1, 1), jnp.float32, -bc2, bc2)
    conv2_b = jax.random.uniform(ks[4], (1,), jnp.float32, -bc2, bc2)
    bo = 1.0 / linear_size ** 0.5
    out_w = jax.random.uniform(ks[5], (n_tri, linear_size), jnp.float32, -bo, bo)
    out_b = jax.random.uniform(ks[6], (n_tri,), jnp.float32, -bo, bo)

    y = simple_conv_only_net_forward(x, conv1_w, conv1_b, conv2_w, conv2_b, out_w, out_b,
                                     output_size=output_size)
    y = jax.block_until_ready(y)

    y_ref = _reference_forward(x, conv1_w, conv1_b, conv2_w, conv2_b, out_w, out_b, output_size)
    assert y.shape == (batch, 1) + output_size
    assert np.allclose(np.asarray(y), y_ref, atol=1e-4, rtol=1e-4), \
        float(np.max(np.abs(np.asarray(y) - y_ref)))
    print("KERNEL_OK")
</pallas_src>

<mosaic_0001>
module attributes {stable_mosaic.version = 11 : i64} {
  func.func @_fused_kernel(%arg0: i32, %arg1: memref<9x8x256xf32, #tpu.memory_space<vmem>>, %arg2: memref<256x128xf32, #tpu.memory_space<vmem>>, %arg3: memref<1x128xf32, #tpu.memory_space<vmem>>, %arg4: memref<36xf32, #tpu.memory_space<smem>>, %arg5: memref<4xf32, #tpu.memory_space<smem>>, %arg6: memref<4xf32, #tpu.memory_space<smem>>, %arg7: memref<1xf32, #tpu.memory_space<smem>>, %arg8: memref<8x128xf32, #tpu.memory_space<vmem>>) attributes {dimension_semantics = [#tpu.dimension_semantics<parallel>], iteration_bounds = array<i64: 1>, scalar_prefetch = 0 : i64, scratch_operands = 0 : i64, tpu.core_type = #tpu.core_type<tc>, window_params = [{transform_indices = @transform_0, window_bounds = array<i64: 9, 8, 256>}, {pipeline_mode = #tpu.pipeline_mode<synchronous>, transform_indices = @transform_1, window_bounds = array<i64: 256, 128>}, {pipeline_mode = #tpu.pipeline_mode<synchronous>, transform_indices = @transform_2, window_bounds = array<i64: 1, 128>}, {transform_indices = @transform_3, window_bounds = array<i64: 36>}, {transform_indices = @transform_4, window_bounds = array<i64: 4>}, {transform_indices = @transform_5, window_bounds = array<i64: 4>}, {transform_indices = @transform_6, window_bounds = array<i64: 1>}, {transform_indices = @transform_7, window_bounds = array<i64: 8, 128>}]} {
    %cst = arith.constant 0.000000e+00 : f32
    %0 = vector.broadcast %cst : f32 to vector<8x256xf32>
    %c0 = arith.constant 0 : index
    %1 = memref.load %arg7[%c0] : memref<1xf32, #tpu.memory_space<smem>>
    %2 = vector.broadcast %1 : f32 to vector<8x256xf32>
    %3 = arith.addf %0, %2 : vector<8x256xf32>
    %c0_0 = arith.constant 0 : index
    %4 = memref.load %arg5[%c0_0] : memref<4xf32, #tpu.memory_space<smem>>
    %5 = vector.broadcast %4 : f32 to vector<8x256xf32>
    %6 = arith.addf %0, %5 : vector<8x256xf32>
    %c0_1 = arith.constant 0 : index
    %c0_2 = arith.constant 0 : index
    %c0_3 = arith.constant 0 : index
    %7 = vector.load %arg1[%c0_1, %c0_2, %c0_3] : memref<9x8x256xf32, #tpu.memory_space<vmem>>, vector<1x8x256xf32>
    %8 = vector.shape_cast %7 : vector<1x8x256xf32> to vector<8x256xf32>
    %c0_4 = arith.constant 0 : index
    %9 = memref.load %arg4[%c0_4] : memref<36xf32, #tpu.memory_space<smem>>
    %10 = vector.broadcast %9 : f32 to vector<8x256xf32>
    %11 = arith.mulf %8, %10 : vector<8x256xf32>
    %12 = arith.addf %6, %11 : vector<8x256xf32>
    %c1 = arith.constant 1 : index
    %c0_5 = arith.constant 0 : index
    %c0_6 = arith.constant 0 : index
    %13 = vector.load %arg1[%c1, %c0_5, %c0_6] : memref<9x8x256xf32, #tpu.memory_space<vmem>>, vector<1x8x256xf32>
    %14 = vector.shape_cast %13 : vector<1x8x256xf32> to vector<8x256xf32>
    %c1_7 = arith.constant 1 : index
    %15 = memref.load %arg4[%c1_7] : memref<36xf32, #tpu.memory_space<smem>>
    %16 = vector.broadcast %15 : f32 to vector<8x256xf32>
    %17 = arith.mulf %14, %16 : vector<8x256xf32>
    %18 = arith.addf %12, %17 : vector<8x256xf32>
    %c2 = arith.constant 2 : index
    %c0_8 = arith.constant 0 : index
    %c0_9 = arith.constant 0 : index
    %19 = vector.load %arg1[%c2, %c0_8, %c0_9] : memref<9x8x256xf32, #tpu.memory_space<vmem>>, vector<1x8x256xf32>
    %20 = vector.shape_cast %19 : vector<1x8x256xf32> to vector<8x256xf32>
    %c2_10 = arith.constant 2 : index
    %21 = memref.load %arg4[%c2_10] : memref<36xf32, #tpu.memory_space<smem>>
    %22 = vector.broadcast %21 : f32 to vector<8x256xf32>
    %23 = arith.mulf %20, %22 : vector<8x256xf32>
    %24 = arith.addf %18, %23 : vector<8x256xf32>
    %c3 = arith.constant 3 : index
    %c0_11 = arith.constant 0 : index
    %c0_12 = arith.constant 0 : index
    %25 = vector.load %arg1[%c3, %c0_11, %c0_12] : memref<9x8x256xf32, #tpu.memory_space<vmem>>, vector<1x8x256xf32>
    %26 = vector.shape_cast %25 : vector<1x8x256xf32> to vector<8x256xf32>
    %c3_13 = arith.constant 3 : index
    %27 = memref.load %arg4[%c3_13] : memref<36xf32, #tpu.memory_space<smem>>
    %28 = vector.broadcast %27 : f32 to vector<8x256xf32>
    %29 = arith.mulf %26, %28 : vector<8x256xf32>
    %30 = arith.addf %24, %29 : vector<8x256xf32>
    %c4 = arith.constant 4 : index
    %c0_14 = arith.constant 0 : index
    %c0_15 = arith.constant 0 : index
    %31 = vector.load %arg1[%c4, %c0_14, %c0_15] : memref<9x8x256xf32, #tpu.memory_space<vmem>>, vector<1x8x256xf32>
    %32 = vector.shape_cast %31 : vector<1x8x256xf32> to vector<8x256xf32>
    %c4_16 = arith.constant 4 : index
    %33 = memref.load %arg4[%c4_16] : memref<36xf32, #tpu.memory_space<smem>>
    %34 = vector.broadcast %33 : f32 to vector<8x256xf32>
    %35 = arith.mulf %32, %34 : vector<8x256xf32>
    %36 = arith.addf %30, %35 : vector<8x256xf32>
    %c5 = arith.constant 5 : index
    %c0_17 = arith.constant 0 : index
    %c0_18 = arith.constant 0 : index
    %37 = vector.load %arg1[%c5, %c0_17, %c0_18] : memref<9x8x256xf32, #tpu.memory_space<vmem>>, vector<1x8x256xf32>
    %38 = vector.shape_cast %37 : vector<1x8x256xf32> to vector<8x256xf32>
    %c5_19 = arith.constant 5 : index
    %39 = memref.load %arg4[%c5_19] : memref<36xf32, #tpu.memory_space<smem>>
    %40 = vector.broadcast %39 : f32 to vector<8x256xf32>
    %41 = arith.mulf %38, %40 : vector<8x256xf32>
    %42 = arith.addf %36, %41 : vector<8x256xf32>
    %c6 = arith.constant 6 : index
    %c0_20 = arith.constant 0 : index
    %c0_21 = arith.constant 0 : index
    %43 = vector.load %arg1[%c6, %c0_20, %c0_21] : memref<9x8x256xf32, #tpu.memory_space<vmem>>, vector<1x8x256xf32>
    %44 = vector.shape_cast %43 : vector<1x8x256xf32> to vector<8x256xf32>
    %c6_22 = arith.constant 6 : index
    %45 = memref.load %arg4[%c6_22] : memref<36xf32, #tpu.memory_space<smem>>
    %46 = vector.broadcast %45 : f32 to vector<8x256xf32>
    %47 = arith.mulf %44, %46 : vector<8x256xf32>
    %48 = arith.addf %42, %47 : vector<8x256xf32>
    %c7 = arith.constant 7 : index
    %c0_23 = arith.constant 0 : index
    %c0_24 = arith.constant 0 : index
    %49 = vector.load %arg1[%c7, %c0_23, %c0_24] : memref<9x8x256xf32, #tpu.memory_space<vmem>>, vector<1x8x256xf32>
    %50 = vector.shape_cast %49 : vector<1x8x256xf32> to vector<8x256xf32>
    %c7_25 = arith.constant 7 : index
    %51 = memref.load %arg4[%c7_25] : memref<36xf32, #tpu.memory_space<smem>>
    %52 = vector.broadcast %51 : f32 to vector<8x256xf32>
    %53 = arith.mulf %50, %52 : vector<8x256xf32>
    %54 = arith.addf %48, %53 : vector<8x256xf32>
    %c8 = arith.constant 8 : index
    %c0_26 = arith.constant 0 : index
    %c0_27 = arith.constant 0 : index
    %55 = vector.load %arg1[%c8, %c0_26, %c0_27] : memref<9x8x256xf32, #tpu.memory_space<vmem>>, vector<1x8x256xf32>
    %56 = vector.shape_cast %55 : vector<1x8x256xf32> to vector<8x256xf32>
    %c8_28 = arith.constant 8 : index
    %57 = memref.load %arg4[%c8_28] : memref<36xf32, #tpu.memory_space<smem>>
    %58 = vector.broadcast %57 : f32 to vector<8x256xf32>
    %59 = arith.mulf %56, %58 : vector<8x256xf32>
    %60 = arith.addf %54, %59 : vector<8x256xf32>
    %cst_29 = arith.constant 0.000000e+00 : f32
    %61 = vector.broadcast %cst_29 : f32 to vector<8x256xf32>
    %62 = arith.maximumf %60, %61 : vector<8x256xf32>
    %c0_30 = arith.constant 0 : index
    %63 = memref.load %arg6[%c0_30] : memref<4xf32, #tpu.memory_space<smem>>
    %64 = vector.broadcast %63 : f32 to vector<8x256xf32>
    %65 = arith.mulf %62, %64 : vector<8x256xf32>
    %66 = arith.addf %3, %65 : vector<8x256xf32>
    %c1_31 = arith.constant 1 : index
    %67 = memref.load %arg5[%c1_31] : memref<4xf32, #tpu.memory_space<smem>>
    %68 = vector.broadcast %67 : f32 to vector<8x256xf32>
    %69 = arith.addf %0, %68 : vector<8x256xf32>
    %c0_32 = arith.constant 0 : index
    %c0_33 = arith.constant 0 : index
    %c0_34 = arith.constant 0 : index
    %70 = vector.load %arg1[%c0_32, %c0_33, %c0_34] : memref<9x8x256xf32, #tpu.memory_space<vmem>>, vector<1x8x256xf32>
    %71 = vector.shape_cast %70 : vector<1x8x256xf32> to vector<8x256xf32>
    %c9 = arith.constant 9 : index
    %72 = memref.load %arg4[%c9] : memref<36xf32, #tpu.memory_space<smem>>
    %73 = vector.broadcast %72 : f32 to vector<8x256xf32>
    %74 = arith.mulf %71, %73 : vector<8x256xf32>
    %75 = arith.addf %69, %74 : vector<8x256xf32>
    %c1_35 = arith.constant 1 : index
    %c0_36 = arith.constant 0 : index
    %c0_37 = arith.constant 0 : index
    %76 = vector.load %arg1[%c1_35, %c0_36, %c0_37] : memref<9x8x256xf32, #tpu.memory_space<vmem>>, vector<1x8x256xf32>
    %77 = vector.shape_cast %76 : vector<1x8x256xf32> to vector<8x256xf32>
    %c10 = arith.constant 10 : index
    %78 = memref.load %arg4[%c10] : memref<36xf32, #tpu.memory_space<smem>>
    %79 = vector.broadcast %78 : f32 to vector<8x256xf32>
    %80 = arith.mulf %77, %79 : vector<8x256xf32>
    %81 = arith.addf %75, %80 : vector<8x256xf32>
    %c2_38 = arith.constant 2 : index
    %c0_39 = arith.constant 0 : index
    %c0_40 = arith.constant 0 : index
    %82 = vector.load %arg1[%c2_38, %c0_39, %c0_40] : memref<9x8x256xf32, #tpu.memory_space<vmem>>, vector<1x8x256xf32>
    %83 = vector.shape_cast %82 : vector<1x8x256xf32> to vector<8x256xf32>
    %c11 = arith.constant 11 : index
    %84 = memref.load %arg4[%c11] : memref<36xf32, #tpu.memory_space<smem>>
    %85 = vector.broadcast %84 : f32 to vector<8x256xf32>
    %86 = arith.mulf %83, %85 : vector<8x256xf32>
    %87 = arith.addf %81, %86 : vector<8x256xf32>
    %c3_41 = arith.constant 3 : index
    %c0_42 = arith.constant 0 : index
    %c0_43 = arith.constant 0 : index
    %88 = vector.load %arg1[%c3_41, %c0_42, %c0_43] : memref<9x8x256xf32, #tpu.memory_space<vmem>>, vector<1x8x256xf32>
    %89 = vector.shape_cast %88 : vector<1x8x256xf32> to vector<8x256xf32>
    %c12 = arith.constant 12 : index
    %90 = memref.load %arg4[%c12] : memref<36xf32, #tpu.memory_space<smem>>
    %91 = vector.broadcast %90 : f32 to vector<8x256xf32>
    %92 = arith.mulf %89, %91 : vector<8x256xf32>
    %93 = arith.addf %87, %92 : vector<8x256xf32>
    %c4_44 = arith.constant 4 : index
    %c0_45 = arith.constant 0 : index
    %c0_46 = arith.constant 0 : index
    %94 = vector.load %arg1[%c4_44, %c0_45, %c0_46] : memref<9x8x256xf32, #tpu.memory_space<vmem>>, vector<1x8x256xf32>
    %95 = vector.shape_cast %94 : vector<1x8x256xf32> to vector<8x256xf32>
    %c13 = arith.constant 13 : index
    %96 = memref.load %arg4[%c13] : memref<36xf32, #tpu.memory_space<smem>>
    %97 = vector.broadcast %96 : f32 to vector<8x256xf32>
    %98 = arith.mulf %95, %97 : vector<8x256xf32>
    %99 = arith.addf %93, %98 : vector<8x256xf32>
    %c5_47 = arith.constant 5 : index
    %c0_48 = arith.constant 0 : index
    %c0_49 = arith.constant 0 : index
    %100 = vector.load %arg1[%c5_47, %c0_48, %c0_49] : memref<9x8x256xf32, #tpu.memory_space<vmem>>, vector<1x8x256xf32>
    %101 = vector.shape_cast %100 : vector<1x8x256xf32> to vector<8x256xf32>
    %c14 = arith.constant 14 : index
    %102 = memref.load %arg4[%c14] : memref<36xf32, #tpu.memory_space<smem>>
    %103 = vector.broadcast %102 : f32 to vector<8x256xf32>
    %104 = arith.mulf %101, %103 : vector<8x256xf32>
    %105 = arith.addf %99, %104 : vector<8x256xf32>
    %c6_50 = arith.constant 6 : index
    %c0_51 = arith.constant 0 : index
    %c0_52 = arith.constant 0 : index
    %106 = vector.load %arg1[%c6_50, %c0_51, %c0_52] : memref<9x8x256xf32, #tpu.memory_space<vmem>>, vector<1x8x256xf32>
    %107 = vector.shape_cast %106 : vector<1x8x256xf32> to vector<8x256xf32>
    %c15 = arith.constant 15 : index
    %108 = memref.load %arg4[%c15] : memref<36xf32, #tpu.memory_space<smem>>
    %109 = vector.broadcast %108 : f32 to vector<8x256xf32>
    %110 = arith.mulf %107, %109 : vector<8x256xf32>
    %111 = arith.addf %105, %110 : vector<8x256xf32>
    %c7_53 = arith.constant 7 : index
    %c0_54 = arith.constant 0 : index
    %c0_55 = arith.constant 0 : index
    %112 = vector.load %arg1[%c7_53, %c0_54, %c0_55] : memref<9x8x256xf32, #tpu.memory_space<vmem>>, vector<1x8x256xf32>
    %113 = vector.shape_cast %112 : vector<1x8x256xf32> to vector<8x256xf32>
    %c16 = arith.constant 16 : index
    %114 = memref.load %arg4[%c16] : memref<36xf32, #tpu.memory_space<smem>>
    %115 = vector.broadcast %114 : f32 to vector<8x256xf32>
    %116 = arith.mulf %113, %115 : vector<8x256xf32>
    %117 = arith.addf %111, %116 : vector<8x256xf32>
    %c8_56 = arith.constant 8 : index
    %c0_57 = arith.constant 0 : index
    %c0_58 = arith.constant 0 : index
    %118 = vector.load %arg1[%c8_56, %c0_57, %c0_58] : memref<9x8x256xf32, #tpu.memory_space<vmem>>, vector<1x8x256xf32>
    %119 = vector.shape_cast %118 : vector<1x8x256xf32> to vector<8x256xf32>
    %c17 = arith.constant 17 : index
    %120 = memref.load %arg4[%c17] : memref<36xf32, #tpu.memory_space<smem>>
    %121 = vector.broadcast %120 : f32 to vector<8x256xf32>
    %122 = arith.mulf %119, %121 : vector<8x256xf32>
    %123 = arith.addf %117, %122 : vector<8x256xf32>
    %cst_59 = arith.constant 0.000000e+00 : f32
    %124 = vector.broadcast %cst_59 : f32 to vector<8x256xf32>
    %125 = arith.maximumf %123, %124 : vector<8x256xf32>
    %c1_60 = arith.constant 1 : index
    %126 = memref.load %arg6[%c1_60] : memref<4xf32, #tpu.memory_space<smem>>
    %127 = vector.broadcast %126 : f32 to vector<8x256xf32>
    %128 = arith.mulf %125, %127 : vector<8x256xf32>
    %129 = arith.addf %66, %128 : vector<8x256xf32>
    %c2_61 = arith.constant 2 : index
    %130 = memref.load %arg5[%c2_61] : memref<4xf32, #tpu.memory_space<smem>>
    %131 = vector.broadcast %130 : f32 to vector<8x256xf32>
    %132 = arith.addf %0, %131 : vector<8x256xf32>
    %c0_62 = arith.constant 0 : index
    %c0_63 = arith.constant 0 : index
    %c0_64 = arith.constant 0 : index
    %133 = vector.load %arg1[%c0_62, %c0_63, %c0_64] : memref<9x8x256xf32, #tpu.memory_space<vmem>>, vector<1x8x256xf32>
    %134 = vector.shape_cast %133 : vector<1x8x256xf32> to vector<8x256xf32>
    %c18 = arith.constant 18 : index
    %135 = memref.load %arg4[%c18] : memref<36xf32, #tpu.memory_space<smem>>
    %136 = vector.broadcast %135 : f32 to vector<8x256xf32>
    %137 = arith.mulf %134, %136 : vector<8x256xf32>
    %138 = arith.addf %132, %137 : vector<8x256xf32>
    %c1_65 = arith.constant 1 : index
    %c0_66 = arith.constant 0 : index
    %c0_67 = arith.constant 0 : index
    %139 = vector.load %arg1[%c1_65, %c0_66, %c0_67] : memref<9x8x256xf32, #tpu.memory_space<vmem>>, vector<1x8x256xf32>
    %140 = vector.shape_cast %139 : vector<1x8x256xf32> to vector<8x256xf32>
    %c19 = arith.constant 19 : index
    %141 = memref.load %arg4[%c19] : memref<36xf32, #tpu.memory_space<smem>>
    %142 = vector.broadcast %141 : f32 to vector<8x256xf32>
    %143 = arith.mulf %140, %142 : vector<8x256xf32>
    %144 = arith.addf %138, %143 : vector<8x256xf32>
    %c2_68 = arith.constant 2 : index
    %c0_69 = arith.constant 0 : index
    %c0_70 = arith.constant 0 : index
    %145 = vector.load %arg1[%c2_68, %c0_69, %c0_70] : memref<9x8x256xf32, #tpu.memory_space<vmem>>, vector<1x8x256xf32>
    %146 = vector.shape_cast %145 : vector<1x8x256xf32> to vector<8x256xf32>
    %c20 = arith.constant 20 : index
    %147 = memref.load %arg4[%c20] : memref<36xf32, #tpu.memory_space<smem>>
    %148 = vector.broadcast %147 : f32 to vector<8x256xf32>
    %149 = arith.mulf %146, %148 : vector<8x256xf32>
    %150 = arith.addf %144, %149 : vector<8x256xf32>
    %c3_71 = arith.constant 3 : index
    %c0_72 = arith.constant 0 : index
    %c0_73 = arith.constant 0 : index
    %151 = vector.load %arg1[%c3_71, %c0_72, %c0_73] : memref<9x8x256xf32, #tpu.memory_space<vmem>>, vector<1x8x256xf32>
    %152 = vector.shape_cast %151 : vector<1x8x256xf32> to vector<8x256xf32>
    %c21 = arith.constant 21 : index
    %153 = memref.load %arg4[%c21] : memref<36xf32, #tpu.memory_space<smem>>
    %154 = vector.broadcast %153 : f32 to vector<8x256xf32>
    %155 = arith.mulf %152, %154 : vector<8x256xf32>
    %156 = arith.addf %150, %155 : vector<8x256xf32>
    %c4_74 = arith.constant 4 : index
    %c0_75 = arith.constant 0 : index
    %c0_76 = arith.constant 0 : index
    %157 = vector.load %arg1[%c4_74, %c0_75, %c0_76] : memref<9x8x256xf32, #tpu.memory_space<vmem>>, vector<1x8x256xf32>
    %158 = vector.shape_cast %157 : vector<1x8x256xf32> to vector<8x256xf32>
    %c22 = arith.constant 22 : index
    %159 = memref.load %arg4[%c22] : memref<36xf32, #tpu.memory_space<smem>>
    %160 = vector.broadcast %159 : f32 to vector<8x256xf32>
    %161 = arith.mulf %158, %160 : vector<8x256xf32>
    %162 = arith.addf %156, %161 : vector<8x256xf32>
    %c5_77 = arith.constant 5 : index
    %c0_78 = arith.constant 0 : index
    %c0_79 = arith.constant 0 : index
    %163 = vector.load %arg1[%c5_77, %c0_78, %c0_79] : memref<9x8x256xf32, #tpu.memory_space<vmem>>, vector<1x8x256xf32>
    %164 = vector.shape_cast %163 : vector<1x8x256xf32> to vector<8x256xf32>
    %c23 = arith.constant 23 : index
    %165 = memref.load %arg4[%c23] : memref<36xf32, #tpu.memory_space<smem>>
    %166 = vector.broadcast %165 : f32 to vector<8x256xf32>
    %167 = arith.mulf %164, %166 : vector<8x256xf32>
    %168 = arith.addf %162, %167 : vector<8x256xf32>
    %c6_80 = arith.constant 6 : index
    %c0_81 = arith.constant 0 : index
    %c0_82 = arith.constant 0 : index
    %169 = vector.load %arg1[%c6_80, %c0_81, %c0_82] : memref<9x8x256xf32, #tpu.memory_space<vmem>>, vector<1x8x256xf32>
    %170 = vector.shape_cast %169 : vector<1x8x256xf32> to vector<8x256xf32>
    %c24 = arith.constant 24 : index
    %171 = memref.load %arg4[%c24] : memref<36xf32, #tpu.memory_space<smem>>
    %172 = vector.broadcast %171 : f32 to vector<8x256xf32>
    %173 = arith.mulf %170, %172 : vector<8x256xf32>
    %174 = arith.addf %168, %173 : vector<8x256xf32>
    %c7_83 = arith.constant 7 : index
    %c0_84 = arith.constant 0 : index
    %c0_85 = arith.constant 0 : index
    %175 = vector.load %arg1[%c7_83, %c0_84, %c0_85] : memref<9x8x256xf32, #tpu.memory_space<vmem>>, vector<1x8x256xf32>
    %176 = vector.shape_cast %175 : vector<1x8x256xf32> to vector<8x256xf32>
    %c25 = arith.constant 25 : index
    %177 = memref.load %arg4[%c25] : memref<36xf32, #tpu.memory_space<smem>>
    %178 = vector.broadcast %177 : f32 to vector<8x256xf32>
    %179 = arith.mulf %176, %178 : vector<8x256xf32>
    %180 = arith.addf %174, %179 : vector<8x256xf32>
    %c8_86 = arith.constant 8 : index
    %c0_87 = arith.constant 0 : index
    %c0_88 = arith.constant 0 : index
    %181 = vector.load %arg1[%c8_86, %c0_87, %c0_88] : memref<9x8x256xf32, #tpu.memory_space<vmem>>, vector<1x8x256xf32>
    %182 = vector.shape_cast %181 : vector<1x8x256xf32> to vector<8x256xf32>
    %c26 = arith.constant 26 : index
    %183 = memref.load %arg4[%c26] : memref<36xf32, #tpu.memory_space<smem>>
    %184 = vector.broadcast %183 : f32 to vector<8x256xf32>
    %185 = arith.mulf %182, %184 : vector<8x256xf32>
    %186 = arith.addf %180, %185 : vector<8x256xf32>
    %cst_89 = arith.constant 0.000000e+00 : f32
    %187 = vector.broadcast %cst_89 : f32 to vector<8x256xf32>
    %188 = arith.maximumf %186, %187 : vector<8x256xf32>
    %c2_90 = arith.constant 2 : index
    %189 = memref.load %arg6[%c2_90] : memref<4xf32, #tpu.memory_space<smem>>
    %190 = vector.broadcast %189 : f32 to vector<8x256xf32>
    %191 = arith.mulf %188, %190 : vector<8x256xf32>
    %192 = arith.addf %129, %191 : vector<8x256xf32>
    %c3_91 = arith.constant 3 : index
    %193 = memref.load %arg5[%c3_91] : memref<4xf32, #tpu.memory_space<smem>>
    %194 = vector.broadcast %193 : f32 to vector<8x256xf32>
    %195 = arith.addf %0, %194 : vector<8x256xf32>
    %c0_92 = arith.constant 0 : index
    %c0_93 = arith.constant 0 : index
    %c0_94 = arith.constant 0 : index
    %196 = vector.load %arg1[%c0_92, %c0_93, %c0_94] : memref<9x8x256xf32, #tpu.memory_space<vmem>>, vector<1x8x256xf32>
    %197 = vector.shape_cast %196 : vector<1x8x256xf32> to vector<8x256xf32>
    %c27 = arith.constant 27 : index
    %198 = memref.load %arg4[%c27] : memref<36xf32, #tpu.memory_space<smem>>
    %199 = vector.broadcast %198 : f32 to vector<8x256xf32>
    %200 = arith.mulf %197, %199 : vector<8x256xf32>
    %201 = arith.addf %195, %200 : vector<8x256xf32>
    %c1_95 = arith.constant 1 : index
    %c0_96 = arith.constant 0 : index
    %c0_97 = arith.constant 0 : index
    %202 = vector.load %arg1[%c1_95, %c0_96, %c0_97] : memref<9x8x256xf32, #tpu.memory_space<vmem>>, vector<1x8x256xf32>
    %203 = vector.shape_cast %202 : vector<1x8x256xf32> to vector<8x256xf32>
    %c28 = arith.constant 28 : index
    %204 = memref.load %arg4[%c28] : memref<36xf32, #tpu.memory_space<smem>>
    %205 = vector.broadcast %204 : f32 to vector<8x256xf32>
    %206 = arith.mulf %203, %205 : vector<8x256xf32>
    %207 = arith.addf %201, %206 : vector<8x256xf32>
    %c2_98 = arith.constant 2 : index
    %c0_99 = arith.constant 0 : index
    %c0_100 = arith.constant 0 : index
    %208 = vector.load %arg1[%c2_98, %c0_99, %c0_100] : memref<9x8x256xf32, #tpu.memory_space<vmem>>, vector<1x8x256xf32>
    %209 = vector.shape_cast %208 : vector<1x8x256xf32> to vector<8x256xf32>
    %c29 = arith.constant 29 : index
    %210 = memref.load %arg4[%c29] : memref<36xf32, #tpu.memory_space<smem>>
    %211 = vector.broadcast %210 : f32 to vector<8x256xf32>
    %212 = arith.mulf %209, %211 : vector<8x256xf32>
    %213 = arith.addf %207, %212 : vector<8x256xf32>
    %c3_101 = arith.constant 3 : index
    %c0_102 = arith.constant 0 : index
    %c0_103 = arith.constant 0 : index
    %214 = vector.load %arg1[%c3_101, %c0_102, %c0_103] : memref<9x8x256xf32, #tpu.memory_space<vmem>>, vector<1x8x256xf32>
    %215 = vector.shape_cast %214 : vector<1x8x256xf32> to vector<8x256xf32>
    %c30 = arith.constant 30 : index
    %216 = memref.load %arg4[%c30] : memref<36xf32, #tpu.memory_space<smem>>
    %217 = vector.broadcast %216 : f32 to vector<8x256xf32>
    %218 = arith.mulf %215, %217 : vector<8x256xf32>
    %219 = arith.addf %213, %218 : vector<8x256xf32>
    %c4_104 = arith.constant 4 : index
    %c0_105 = arith.constant 0 : index
    %c0_106 = arith.constant 0 : index
    %220 = vector.load %arg1[%c4_104, %c0_105, %c0_106] : memref<9x8x256xf32, #tpu.memory_space<vmem>>, vector<1x8x256xf32>
    %221 = vector.shape_cast %220 : vector<1x8x256xf32> to vector<8x256xf32>
    %c31 = arith.constant 31 : index
    %222 = memref.load %arg4[%c31] : memref<36xf32, #tpu.memory_space<smem>>
    %223 = vector.broadcast %222 : f32 to vector<8x256xf32>
    %224 = arith.mulf %221, %223 : vector<8x256xf32>
    %225 = arith.addf %219, %224 : vector<8x256xf32>
    %c5_107 = arith.constant 5 : index
    %c0_108 = arith.constant 0 : index
    %c0_109 = arith.constant 0 : index
    %226 = vector.load %arg1[%c5_107, %c0_108, %c0_109] : memref<9x8x256xf32, #tpu.memory_space<vmem>>, vector<1x8x256xf32>
    %227 = vector.shape_cast %226 : vector<1x8x256xf32> to vector<8x256xf32>
    %c32 = arith.constant 32 : index
    %228 = memref.load %arg4[%c32] : memref<36xf32, #tpu.memory_space<smem>>
    %229 = vector.broadcast %228 : f32 to vector<8x256xf32>
    %230 = arith.mulf %227, %229 : vector<8x256xf32>
    %231 = arith.addf %225, %230 : vector<8x256xf32>
    %c6_110 = arith.constant 6 : index
    %c0_111 = arith.constant 0 : index
    %c0_112 = arith.constant 0 : index
    %232 = vector.load %arg1[%c6_110, %c0_111, %c0_112] : memref<9x8x256xf32, #tpu.memory_space<vmem>>, vector<1x8x256xf32>
    %233 = vector.shape_cast %232 : vector<1x8x256xf32> to vector<8x256xf32>
    %c33 = arith.constant 33 : index
    %234 = memref.load %arg4[%c33] : memref<36xf32, #tpu.memory_space<smem>>
    %235 = vector.broadcast %234 : f32 to vector<8x256xf32>
    %236 = arith.mulf %233, %235 : vector<8x256xf32>
    %237 = arith.addf %231, %236 : vector<8x256xf32>
    %c7_113 = arith.constant 7 : index
    %c0_114 = arith.constant 0 : index
    %c0_115 = arith.constant 0 : index
    %238 = vector.load %arg1[%c7_113, %c0_114, %c0_115] : memref<9x8x256xf32, #tpu.memory_space<vmem>>, vector<1x8x256xf32>
    %239 = vector.shape_cast %238 : vector<1x8x256xf32> to vector<8x256xf32>
    %c34 = arith.constant 34 : index
    %240 = memref.load %arg4[%c34] : memref<36xf32, #tpu.memory_space<smem>>
    %241 = vector.broadcast %240 : f32 to vector<8x256xf32>
    %242 = arith.mulf %239, %241 : vector<8x256xf32>
    %243 = arith.addf %237, %242 : vector<8x256xf32>
    %c8_116 = arith.constant 8 : index
    %c0_117 = arith.constant 0 : index
    %c0_118 = arith.constant 0 : index
    %244 = vector.load %arg1[%c8_116, %c0_117, %c0_118] : memref<9x8x256xf32, #tpu.memory_space<vmem>>, vector<1x8x256xf32>
    %245 = vector.shape_cast %244 : vector<1x8x256xf32> to vector<8x256xf32>
    %c35 = arith.constant 35 : index
    %246 = memref.load %arg4[%c35] : memref<36xf32, #tpu.memory_space<smem>>
    %247 = vector.broadcast %246 : f32 to vector<8x256xf32>
    %248 = arith.mulf %245, %247 : vector<8x256xf32>
    %249 = arith.addf %243, %248 : vector<8x256xf32>
    %cst_119 = arith.constant 0.000000e+00 : f32
    %250 = vector.broadcast %cst_119 : f32 to vector<8x256xf32>
    %251 = arith.maximumf %249, %250 : vector<8x256xf32>
    %c3_120 = arith.constant 3 : index
    %252 = memref.load %arg6[%c3_120] : memref<4xf32, #tpu.memory_space<smem>>
    %253 = vector.broadcast %252 : f32 to vector<8x256xf32>
    %254 = arith.mulf %251, %253 : vector<8x256xf32>
    %255 = arith.addf %192, %254 : vector<8x256xf32>
    %c0_121 = arith.constant 0 : index
    %c0_122 = arith.constant 0 : index
    %256 = vector.load %arg2[%c0_121, %c0_122] : memref<256x128xf32, #tpu.memory_space<vmem>>, vector<256x128xf32>
    %cst_123 = arith.constant dense<0.000000e+00> : vector<8x128xf32>
    %257 = tpu.matmul %255, %256, %cst_123 {dimension_numbers = #tpu.dot_dimension_numbers<[1], [0], [0], [1], [0, 0, 1, 1], [], []>} : vector<8x256xf32>, vector<256x128xf32>, vector<8x128xf32> -> vector<8x128xf32>
    %c0_124 = arith.constant 0 : index
    %c0_125 = arith.constant 0 : index
    %258 = vector.load %arg3[%c0_124, %c0_125] : memref<1x128xf32, #tpu.memory_space<vmem>>, vector<1x128xf32>
    %259 = vector.broadcast %258 : vector<1x128xf32> to vector<8x128xf32>
    %260 = arith.addf %257, %259 : vector<8x128xf32>
    %c0_126 = arith.constant 0 : index
    %c0_127 = arith.constant 0 : index
    %261 = vector.load %arg8[%c0_126, %c0_127] : memref<8x128xf32, #tpu.memory_space<vmem>>, vector<8x128xf32>
    tpu.vector_store %arg8[%c0_126, %c0_127], %260 {strides = array<i32>} : memref<8x128xf32, #tpu.memory_space<vmem>>, vector<8x128xf32>,
    return
  }
  func.func @transform_0(%arg0: i32) -> (i32, i32, i32) {
    %c0_i32 = arith.constant 0 : i32
    %c0_i32_0 = arith.constant 0 : i32
    %c0_i32_1 = arith.constant 0 : i32
    return %c0_i32, %arg0, %c0_i32_0 : i32, i32, i32
  }
  func.func @transform_1(%arg0: i32) -> (i32, i32) {
    %c0_i32 = arith.constant 0 : i32
    %c0_i32_0 = arith.constant 0 : i32
    %c0_i32_1 = arith.constant 0 : i32
    return %c0_i32, %c0_i32_0 : i32, i32
  }
  func.func @transform_2(%arg0: i32) -> (i32, i32) {
    %c0_i32 = arith.constant 0 : i32
    %c0_i32_0 = arith.constant 0 : i32
    %c0_i32_1 = arith.constant 0 : i32
    return %c0_i32, %c0_i32_0 : i32, i32
  }
  func.func @transform_3(%arg0: i32) -> i32 {
    %c0_i32 = arith.constant 0 : i32
    %c0_i32_0 = arith.constant 0 : i32
    return %c0_i32 : i32
  }
  func.func @transform_4(%arg0: i32) -> i32 {
    %c0_i32 = arith.constant 0 : i32
    %c0_i32_0 = arith.constant 0 : i32
    return %c0_i32 : i32
  }
  func.func @transform_5(%arg0: i32) -> i32 {
    %c0_i32 = arith.constant 0 : i32
    %c0_i32_0 = arith.constant 0 : i32
    return %c0_i32 : i32
  }
  func.func @transform_6(%arg0: i32) -> i32 {
    %c0_i32 = arith.constant 0 : i32
    %c0_i32_0 = arith.constant 0 : i32
    return %c0_i32 : i32
  }
  func.func @transform_7(%arg0: i32) -> (i32, i32) {
    %c0_i32 = arith.constant 0 : i32
    %c0_i32_0 = arith.constant 0 : i32
    return %arg0, %c0_i32 : i32, i32
  }
}

</mosaic_0001>

<llo_original>
// kernel: simple_conv_only_net_forward.1
$region0: #{simple_conv_only_net_forward.1}
  #allocation0 [shape = 'u32[]', space=smem, size = 0x4, offset = 0x4, fixed_abs, tag = 'smem constant byte address 0x4 - core index']
  #allocation1 [shape = 'u32[144,128]{1,0:T(1,128)}', space=vmem, size = 0x12000, scoped, tag = 'internal scratch']
  #allocation2 [shape = 'f32[1]{0:T(128)S(6)}', space=smem, size = 0x200, scoped, tag = 'scoped memory for simple_conv_only_net_forward.1']
  %s0 = inlined_call_operand.vmem [shape: f32[9,8,256], index: 0, kind: input, shape index: {}]
  %s1 = inlined_call_operand.vmem [shape: f32[256,128], index: 1, kind: input, shape index: {}]
  %s2 = inlined_call_operand.vmem [shape: f32[1,128], index: 2, kind: input, shape index: {}]
  %s3 = inlined_call_operand.vmem [shape: f32[36], index: 3, kind: input, shape index: {}]
  %s4 = inlined_call_operand.vmem [shape: f32[4], index: 4, kind: input, shape index: {}]
  %s5 = inlined_call_operand.vmem [shape: f32[4], index: 5, kind: input, shape index: {}]
  %s6 = inlined_call_operand.<no memory space> [shape: f32[1], index: 6, kind: input, shape index: {}]
  %s7 = inlined_call_operand.vmem [shape: f32[8,128], index: 7, kind: output, shape index: {}]
  %s8 = sld [smem:[#allocation0]]
  $region50: #{simple_conv_only_net_forward.1} parent=0
    _
  %s10 = ssub.s32 1, %s8
  %s11 = scalar_select 0, %s10, %s8
  %12 = sst [smem:[#allocation2]] %s6
  $region1: #{simple_conv_only_net_forward.1} parent=0
    #allocation3 [shape = 'u8[512]{0}', space=smem, size = 0x200, scoped, tag = 'input window, operand 3, single buffered']
    #allocation4 [shape = 's32[1]{0}', space=sflag, size = 0x4, scoped, tag = 'scoped memory for simple_conv_only_net_forward.1']
    #allocation5 [shape = 'u8[512]{0}', space=smem, size = 0x200, scoped, tag = 'input window, operand 4, single buffered']
    #allocation6 [shape = 's32[1]{0}', space=sflag, size = 0x4, scoped, tag = 'scoped memory for simple_conv_only_net_forward.1']
    #allocation7 [shape = 'u8[512]{0}', space=smem, size = 0x200, scoped, tag = 'input window, operand 5, single buffered']
    %13 = vsyncpa [#allocation4], 0
    %14 = vsyncpa [#allocation6], 0
    // Predicated region
    $region2: #{simple_conv_only_net_forward.1} parent=1 // pred_check
      _
    $region3: #{simple_conv_only_net_forward.1} parent=1 // pred_check_branch
      %16 = sbr.rel (0) target = $region5
    $region4: #{simple_conv_only_net_forward.1} parent=1 // pred_region
      _
    $region5: #{simple_conv_only_net_forward.1} parent=1 // pred_fallthru
      _
    // Predicated region
    $region6: #{simple_conv_only_net_forward.1} parent=1 // pred_check
      _
    $region7: #{simple_conv_only_net_forward.1} parent=1 // pred_check_branch
      %18 = sbr.rel (0) target = $region9
    $region8: #{simple_conv_only_net_forward.1} parent=1 // pred_region
      _
    $region9: #{simple_conv_only_net_forward.1} parent=1 // pred_fallthru
      _
    // Predicated region
    $region10: #{simple_conv_only_net_forward.1} parent=1 // pred_check
      _
    $region11: #{simple_conv_only_net_forward.1} parent=1 // pred_check_branch
      %20 = sbr.rel (0) target = $region13
    $region12: #{simple_conv_only_net_forward.1} parent=1 // pred_region
      _
    $region13: #{simple_conv_only_net_forward.1} parent=1 // pred_fallthru
      _
    // Predicated region
    $region14: #{simple_conv_only_net_forward.1} parent=1 // pred_check
      _
    $region15: #{simple_conv_only_net_forward.1} parent=1 // pred_check_branch
      %22 = sbr.rel (0) target = $region17
    $region16: #{simple_conv_only_net_forward.1} parent=1 // pred_region
      %s24 = ssub.s32 16, 16
      %25 = vsyncadd [#allocation4], %s24
      %s27 = sshll.u32 %s3, 4
      %s28 = int_to_ptr.vmem [resolvable:$true] %s27
      %30 = dma.vmem_to_smem %s28, 16, [#allocation3], [#allocation4]
    $region17: #{simple_conv_only_net_forward.1} parent=1 // pred_fallthru
      _
    // Predicated region
    $region18: #{simple_conv_only_net_forward.1} parent=1 // pred_check
      _
    $region19: #{simple_conv_only_net_forward.1} parent=1 // pred_check_branch
      %32 = sbr.rel (0) target = $region21
    $region20: #{simple_conv_only_net_forward.1} parent=1 // pred_region
      %s34 = ssub.s32 16, 16
      %35 = vsyncadd [#allocation6], %s34
      %s37 = sshll.u32 %s4, 4
      %s38 = int_to_ptr.vmem [resolvable:$true] %s37
      %40 = dma.vmem_to_smem %s38, 16, [#allocation5], [#allocation6]
    $region21: #{simple_conv_only_net_forward.1} parent=1 // pred_fallthru
      _
    // Predicated region
    $region22: #{simple_conv_only_net_forward.1} parent=1 // pred_check
      _
    $region23: #{simple_conv_only_net_forward.1} parent=1 // pred_check_branch
      %42 = sbr.rel (0) target = $region25
    $region24: #{simple_conv_only_net_forward.1} parent=1 // pred_region
      %s44 = ssub.s32 16, 16
      %45 = vsyncadd [#allocation6], %s44
      %s47 = sshll.u32 %s5, 4
      %s48 = int_to_ptr.vmem [resolvable:$true] %s47
      %50 = dma.vmem_to_smem %s48, 16, [#allocation7], [#allocation6]
    $region25: #{simple_conv_only_net_forward.1} parent=1 // pred_fallthru
      _
    // Predicated region
    $region26: #{simple_conv_only_net_forward.1} parent=1 // pred_check
      _
    $region27: #{simple_conv_only_net_forward.1} parent=1 // pred_check_branch
      %52 = sbr.rel (0) target = $region29
    $region28: #{simple_conv_only_net_forward.1} parent=1 // pred_region
      _
    $region29: #{simple_conv_only_net_forward.1} parent=1 // pred_fallthru
      _
    // Predicated region
    $region30: #{simple_conv_only_net_forward.1} parent=1 // pred_check
      _
    $region31: #{simple_conv_only_net_forward.1} parent=1 // pred_check_branch
      %54 = sbr.rel (0) target = $region33
    $region32: #{simple_conv_only_net_forward.1} parent=1 // pred_region
      %55 = dma.done [#allocation4], 16
    $region33: #{simple_conv_only_net_forward.1} parent=1 // pred_fallthru
      _
    // Predicated region
    $region34: #{simple_conv_only_net_forward.1} parent=1 // pred_check
      _
    $region35: #{simple_conv_only_net_forward.1} parent=1 // pred_check_branch
      %57 = sbr.rel (0) target = $region37
    $region36: #{simple_conv_only_net_forward.1} parent=1 // pred_region
      %58 = dma.done [#allocation6], 16
    $region37: #{simple_conv_only_net_forward.1} parent=1 // pred_fallthru
      _
    // Predicated region
    $region38: #{simple_conv_only_net_forward.1} parent=1 // pred_check
      _
    $region39: #{simple_conv_only_net_forward.1} parent=1 // pred_check_branch
      %60 = sbr.rel (0) target = $region41
    $region40: #{simple_conv_only_net_forward.1} parent=1 // pred_region
      %61 = dma.done [#allocation6], 16
    $region41: #{simple_conv_only_net_forward.1} parent=1 // pred_fallthru
      _
    %62 = sfence
    %s63 = sld [smem:[#allocation2]]
    %v64 = vstv %s63
    %v65 = vadd.f32 %v64, 0.0
    %s66 = sld [smem:[#allocation5]]
    %v67 = vstv %s66
    %v68 = vadd.f32 %v67, 0.0
    %v69 = vld [vmem:[%s0] sm:$0xff]
    %v70 = vld [vmem:[%s0 + $0x8] sm:$0xff]
    %s71 = sld [smem:[#allocation3]]
    %v72 = vstv %s71
    %v73 = vmul.f32 %v69, %v72
    %v74 = vmul.f32 %v70, %v72
    %v75 = vadd.f32 %v68, %v73
    %v76 = vadd.f32 %v68, %v74
    %s77 = scalar_lea.vmem %s0, 16
    %v78 = vld [vmem:[%s77] sm:$0xff]
    %v79 = vld [vmem:[%s77 + $0x8] sm:$0xff]
    %s80 = sld [smem:[#allocation3 + $0x1]]
    %v81 = vstv %s80
    %v82 = vmul.f32 %v78, %v81
    %v83 = vmul.f32 %v79, %v81
    %v84 = vadd.f32 %v75, %v82
    %v85 = vadd.f32 %v76, %v83
    %s86 = scalar_lea.vmem %s0, 32
    %v87 = vld [vmem:[%s86] sm:$0xff]
    %v88 = vld [vmem:[%s86 + $0x8] sm:$0xff]
    %s89 = sld [smem:[#allocation3 + $0x2]]
    %v90 = vstv %s89
    %v91 = vmul.f32 %v87, %v90
    %v92 = vmul.f32 %v88, %v90
    %v93 = vadd.f32 %v84, %v91
    %v94 = vadd.f32 %v85, %v92
    %s95 = scalar_lea.vmem %s0, 48
    %v96 = vld [vmem:[%s95] sm:$0xff]
    %v97 = vld [vmem:[%s95 + $0x8] sm:$0xff]
    %s98 = sld [smem:[#allocation3 + $0x3]]
    %v99 = vstv %s98
    %v100 = vmul.f32 %v96, %v99
    %v101 = vmul.f32 %v97, %v99
    %v102 = vadd.f32 %v93, %v100
    %v103 = vadd.f32 %v94, %v101
    %s104 = scalar_lea.vmem %s0, 64
    %v105 = vld [vmem:[%s104] sm:$0xff]
    %v106 = vld [vmem:[%s104 + $0x8] sm:$0xff]
    %s107 = sld [smem:[#allocation3 + $0x4]]
    %v108 = vstv %s107
    %v109 = vmul.f32 %v105, %v108
    %v110 = vmul.f32 %v106, %v108
    %v111 = vadd.f32 %v102, %v109
    %v112 = vadd.f32 %v103, %v110
    %s113 = scalar_lea.vmem %s0, 80
    %v114 = vld [vmem:[%s113] sm:$0xff]
    %v115 = vld [vmem:[%s113 + $0x8] sm:$0xff]
    %s116 = sld [smem:[#allocation3 + $0x5]]
    %v117 = vstv %s116
    %v118 = vmul.f32 %v114, %v117
    %v119 = vmul.f32 %v115, %v117
    %v120 = vadd.f32 %v111, %v118
    %v121 = vadd.f32 %v112, %v119
    %s122 = scalar_lea.vmem %s0, 96
    %v123 = vld [vmem:[%s122] sm:$0xff]
    %v124 = vld [vmem:[%s122 + $0x8] sm:$0xff]
    %s125 = sld [smem:[#allocation3 + $0x6]]
    %v126 = vstv %s125
    %v127 = vmul.f32 %v123, %v126
    %v128 = vmul.f32 %v124, %v126
    %v129 = vadd.f32 %v120, %v127
    %v130 = vadd.f32 %v121, %v128
    %s131 = scalar_lea.vmem %s0, 112
    %v132 = vld [vmem:[%s131] sm:$0xff]
    %v133 = vld [vmem:[%s131 + $0x8] sm:$0xff]
    %s134 = sld [smem:[#allocation3 + $0x7]]
    %v135 = vstv %s134
    %v136 = vmul.f32 %v132, %v135
    %v137 = vmul.f32 %v133, %v135
    %v138 = vadd.f32 %v129, %v136
    %v139 = vadd.f32 %v130, %v137
    %s140 = scalar_lea.vmem %s0, 128
    %v141 = vld [vmem:[%s140] sm:$0xff]
    %v142 = vld [vmem:[%s140 + $0x8] sm:$0xff]
    %s143 = sld [smem:[#allocation3 + $0x8]]
    %v144 = vstv %s143
    %v145 = vmul.f32 %v141, %v144
    %v146 = vmul.f32 %v142, %v144
    %v147 = vadd.f32 %v138, %v145
    %v148 = vadd.f32 %v139, %v146
    %v149 = vmax.f32 %v147, 0.0
    %v150 = vmax.f32 %v148, 0.0
    %s151 = sld [smem:[#allocation7]]
    %v152 = vstv %s151
    %v153 = vmul.f32 %v149, %v152
    %v154 = vmul.f32 %v150, %v152
    %v155 = vadd.f32 %v65, %v153
    %v156 = vadd.f32 %v65, %v154
    %s157 = sld [smem:[#allocation5 + $0x1]]
    %v158 = vstv %s157
    %v159 = vadd.f32 %v158, 0.0
    %s160 = sld [smem:[#allocation3 + $0x9]]
    %v161 = vstv %s160
    %v162 = vmul.f32 %v69, %v161
    %v163 = vmul.f32 %v70, %v161
    %v164 = vadd.f32 %v159, %v162
    %v165 = vadd.f32 %v159, %v163
    %s166 = sld [smem:[#allocation3 + $0xa]]
    %v167 = vstv %s166
    %v168 = vmul.f32 %v78, %v167
    %v169 = vmul.f32 %v79, %v167
    %v170 = vadd.f32 %v164, %v168
    %v171 = vadd.f32 %v165, %v169
    %s172 = sld [smem:[#allocation3 + $0xb]]
    %v173 = vstv %s172
    %v174 = vmul.f32 %v87, %v173
    %v175 = vmul.f32 %v88, %v173
    %v176 = vadd.f32 %v170, %v174
    %v177 = vadd.f32 %v171, %v175
    %s178 = sld [smem:[#allocation3 + $0xc]]
    %v179 = vstv %s178
    %v180 = vmul.f32 %v96, %v179
    %v181 = vmul.f32 %v97, %v179
    %v182 = vadd.f32 %v176, %v180
    %v183 = vadd.f32 %v177, %v181
    %s184 = sld [smem:[#allocation3 + $0xd]]
    %v185 = vstv %s184
    %v186 = vmul.f32 %v105, %v185
    %v187 = vmul.f32 %v106, %v185
    %v188 = vadd.f32 %v182, %v186
    %v189 = vadd.f32 %v183, %v187
    %s190 = sld [smem:[#allocation3 + $0xe]]
    %v191 = vstv %s190
    %v192 = vmul.f32 %v114, %v191
    %v193 = vmul.f32 %v115, %v191
    %v194 = vadd.f32 %v188, %v192
    %v195 = vadd.f32 %v189, %v193
    %s196 = sld [smem:[#allocation3 + $0xf]]
    %v197 = vstv %s196
    %v198 = vmul.f32 %v123, %v197
    %v199 = vmul.f32 %v124, %v197
    %v200 = vadd.f32 %v194, %v198
    %v201 = vadd.f32 %v195, %v199
    %s202 = sld [smem:[#allocation3 + $0x10]]
    %v203 = vstv %s202
    %v204 = vmul.f32 %v132, %v203
    %v205 = vmul.f32 %v133, %v203
    %v206 = vadd.f32 %v200, %v204
    %v207 = vadd.f32 %v201, %v205
    %s208 = sld [smem:[#allocation3 + $0x11]]
    %v209 = vstv %s208
    %v210 = vmul.f32 %v141, %v209
    %v211 = vmul.f32 %v142, %v209
    %v212 = vadd.f32 %v206, %v210
    %v213 = vadd.f32 %v207, %v211
    %v214 = vmax.f32 %v212, 0.0
    %v215 = vmax.f32 %v213, 0.0
    %s216 = sld [smem:[#allocation7 + $0x1]]
    %v217 = vstv %s216
    %v218 = vmul.f32 %v214, %v217
    %v219 = vmul.f32 %v215, %v217
    %v220 = vadd.f32 %v155, %v218
    %v221 = vadd.f32 %v156, %v219
    %s222 = sld [smem:[#allocation5 + $0x2]]
    %v223 = vstv %s222
    %v224 = vadd.f32 %v223, 0.0
    %s225 = sld [smem:[#allocation3 + $0x12]]
    %v226 = vstv %s225
    %v227 = vmul.f32 %v69, %v226
    %v228 = vmul.f32 %v70, %v226
    %v229 = vadd.f32 %v224, %v227
    %v230 = vadd.f32 %v224, %v228
    %s231 = sld [smem:[#allocation3 + $0x13]]
    %v232 = vstv %s231
    %v233 = vmul.f32 %v78, %v232
    %v234 = vmul.f32 %v79, %v232
    %v235 = vadd.f32 %v229, %v233
    %v236 = vadd.f32 %v230, %v234
    %s237 = sld [smem:[#allocation3 + $0x14]]
    %v238 = vstv %s237
    %v239 = vmul.f32 %v87, %v238
    %v240 = vmul.f32 %v88, %v238
    %v241 = vadd.f32 %v235, %v239
    %v242 = vadd.f32 %v236, %v240
    %s243 = sld [smem:[#allocation3 + $0x15]]
    %v244 = vstv %s243
    %v245 = vmul.f32 %v96, %v244
    %v246 = vmul.f32 %v97, %v244
    %v247 = vadd.f32 %v241, %v245
    %v248 = vadd.f32 %v242, %v246
    %s249 = sld [smem:[#allocation3 + $0x16]]
    %v250 = vstv %s249
    %v251 = vmul.f32 %v105, %v250
    %v252 = vmul.f32 %v106, %v250
    %v253 = vadd.f32 %v247, %v251
    %v254 = vadd.f32 %v248, %v252
    %s255 = sld [smem:[#allocation3 + $0x17]]
    %v256 = vstv %s255
    %v257 = vmul.f32 %v114, %v256
    %v258 = vmul.f32 %v115, %v256
    %v259 = vadd.f32 %v253, %v257
    %v260 = vadd.f32 %v254, %v258
    %s261 = sld [smem:[#allocation3 + $0x18]]
    %v262 = vstv %s261
    %v263 = vmul.f32 %v123, %v262
    %v264 = vmul.f32 %v124, %v262
    %v265 = vadd.f32 %v259, %v263
    %v266 = vadd.f32 %v260, %v264
    %s267 = sld [smem:[#allocation3 + $0x19]]
    %v268 = vstv %s267
    %v269 = vmul.f32 %v132, %v268
    %v270 = vmul.f32 %v133, %v268
    %v271 = vadd.f32 %v265, %v269
    %v272 = vadd.f32 %v266, %v270
    %s273 = sld [smem:[#allocation3 + $0x1a]]
    %v274 = vstv %s273
    %v275 = vmul.f32 %v141, %v274
    %v276 = vmul.f32 %v142, %v274
    %v277 = vadd.f32 %v271, %v275
    %v278 = vadd.f32 %v272, %v276
    %v279 = vmax.f32 %v277, 0.0
    %v280 = vmax.f32 %v278, 0.0
    %s281 = sld [smem:[#allocation7 + $0x2]]
    %v282 = vstv %s281
    %v283 = vmul.f32 %v279, %v282
    %v284 = vmul.f32 %v280, %v282
    %v285 = vadd.f32 %v220, %v283
    %v286 = vadd.f32 %v221, %v284
    %s287 = sld [smem:[#allocation5 + $0x3]]
    %v288 = vstv %s287
    %v289 = vadd.f32 %v288, 0.0
    %s290 = sld [smem:[#allocation3 + $0x1b]]
    %v291 = vstv %s290
    %v292 = vmul.f32 %v69, %v291
    %v293 = vmul.f32 %v70, %v291
    %v294 = vadd.f32 %v289, %v292
    %v295 = vadd.f32 %v289, %v293
    %s296 = sld [smem:[#allocation3 + $0x1c]]
    %v297 = vstv %s296
    %v298 = vmul.f32 %v78, %v297
    %v299 = vmul.f32 %v79, %v297
    %v300 = vadd.f32 %v294, %v298
    %v301 = vadd.f32 %v295, %v299
    %s302 = sld [smem:[#allocation3 + $0x1d]]
    %v303 = vstv %s302
    %v304 = vmul.f32 %v87, %v303
    %v305 = vmul.f32 %v88, %v303
    %v306 = vadd.f32 %v300, %v304
    %v307 = vadd.f32 %v301, %v305
    %s308 = sld [smem:[#allocation3 + $0x1e]]
    %v309 = vstv %s308
    %v310 = vmul.f32 %v96, %v309
    %v311 = vmul.f32 %v97, %v309
    %v312 = vadd.f32 %v306, %v310
    %v313 = vadd.f32 %v307, %v311
    %s314 = sld [smem:[#allocation3 + $0x1f]]
    %v315 = vstv %s314
    %v316 = vmul.f32 %v105, %v315
    %v317 = vmul.f32 %v106, %v315
    %v318 = vadd.f32 %v312, %v316
    %v319 = vadd.f32 %v313, %v317
    %s320 = sld [smem:[#allocation3 + $0x20]]
    %v321 = vstv %s320
    %v322 = vmul.f32 %v114, %v321
    %v323 = vmul.f32 %v115, %v321
    %v324 = vadd.f32 %v318, %v322
    %v325 = vadd.f32 %v319, %v323
    %s326 = sld [smem:[#allocation3 + $0x21]]
    %v327 = vstv %s326
    %v328 = vmul.f32 %v123, %v327
    %v329 = vmul.f32 %v124, %v327
    %v330 = vadd.f32 %v324, %v328
    %v331 = vadd.f32 %v325, %v329
    %s332 = sld [smem:[#allocation3 + $0x22]]
    %v333 = vstv %s332
    %v334 = vmul.f32 %v132, %v333
    %v335 = vmul.f32 %v133, %v333
    %v336 = vadd.f32 %v330, %v334
    %v337 = vadd.f32 %v331, %v335
    %s338 = sld [smem:[#allocation3 + $0x23]]
    %v339 = vstv %s338
    %v340 = vmul.f32 %v141, %v339
    %v341 = vmul.f32 %v142, %v339
    %v342 = vadd.f32 %v336, %v340
    %v343 = vadd.f32 %v337, %v341
    %v344 = vmax.f32 %v342, 0.0
    %v345 = vmax.f32 %v343, 0.0
    %s346 = sld [smem:[#allocation7 + $0x3]]
    %v347 = vstv %s346
    %v348 = vmul.f32 %v344, %v347
    %v349 = vmul.f32 %v345, %v347
    %v350 = vadd.f32 %v285, %v348
    %v351 = vadd.f32 %v286, %v349
    %v352 = vld [vmem:[%s1] sm:$0xff]
    %v353 = vld [vmem:[%s1 + $0x8] sm:$0xff]
    %v354 = vld [vmem:[%s1 + $0x10] sm:$0xff]
    %v355 = vld [vmem:[%s1 + $0x18] sm:$0xff]
    %v356 = vld [vmem:[%s1 + $0x20] sm:$0xff]
    %v357 = vld [vmem:[%s1 + $0x28] sm:$0xff]
    %v358 = vld [vmem:[%s1 + $0x30] sm:$0xff]
    %v359 = vld [vmem:[%s1 + $0x38] sm:$0xff]
    %v360 = vld [vmem:[%s1 + $0x40] sm:$0xff]
    %v361 = vld [vmem:[%s1 + $0x48] sm:$0xff]
    %v362 = vld [vmem:[%s1 + $0x50] sm:$0xff]
    %v363 = vld [vmem:[%s1 + $0x58] sm:$0xff]
    %v364 = vld [vmem:[%s1 + $0x60] sm:$0xff]
    %v365 = vld [vmem:[%s1 + $0x68] sm:$0xff]
    %v366 = vld [vmem:[%s1 + $0x70] sm:$0xff]
    %v367 = vld [vmem:[%s1 + $0x78] sm:$0xff]
    %v368 = vld [vmem:[%s1 + $0x80] sm:$0xff]
    %v369 = vld [vmem:[%s1 + $0x88] sm:$0xff]
    %v370 = vld [vmem:[%s1 + $0x90] sm:$0xff]
    %v371 = vld [vmem:[%s1 + $0x98] sm:$0xff]
    %v372 = vld [vmem:[%s1 + $0xa0] sm:$0xff]
    %v373 = vld [vmem:[%s1 + $0xa8] sm:$0xff]
    %v374 = vld [vmem:[%s1 + $0xb0] sm:$0xff]
    %v375 = vld [vmem:[%s1 + $0xb8] sm:$0xff]
    %v376 = vld [vmem:[%s1 + $0xc0] sm:$0xff]
    %v377 = vld [vmem:[%s1 + $0xc8] sm:$0xff]
    %v378 = vld [vmem:[%s1 + $0xd0] sm:$0xff]
    %v379 = vld [vmem:[%s1 + $0xd8] sm:$0xff]
    %v380 = vld [vmem:[%s1 + $0xe0] sm:$0xff]
    %v381 = vld [vmem:[%s1 + $0xe8] sm:$0xff]
    %v382 = vld [vmem:[%s1 + $0xf0] sm:$0xff]
    %v383 = vld [vmem:[%s1 + $0xf8] sm:$0xff]
    %v384 = vld [vmem:[%s2] sm:$0x1]
    %v386 = vlaneseq
    %v387 = vshrl.u32 %v386, 7
    %v388 = vsub.s32 0, %v387
    %v389 = vrot.slane %v384, %v388
    %391 = vmatprep.subr.mxu0 0.0
    %392 = vmatpush1.msra.mxu0 %v352
    %393 = vmatprep.subr.mxu0 0.0
    %394 = vmatpush1.msra.mxu0 %v353
    %395 = vmatprep.subr.mxu0 0.0
    %396 = vmatpush1.msra.mxu0 %v354
    %397 = vmatprep.subr.mxu0 0.0
    %398 = vmatpush1.msra.mxu0 %v355
    %399 = vmatprep.subr.mxu0 0.0
    %400 = vmatpush1.msra.mxu0 %v356
    %401 = vmatprep.subr.mxu0 0.0
    %402 = vmatpush1.msra.mxu0 %v357
    %403 = vmatprep.subr.mxu0 0.0
    %404 = vmatpush1.msra.mxu0 %v358
    %405 = vmatprep.subr.mxu0 0.0
    %406 = vmatpush1.msra.mxu0 %v359
    %407 = vmatprep.subr.mxu0 0.0
    %408 = vmatpush1.msra.mxu0 %v360
    %409 = vmatprep.subr.mxu0 0.0
    %410 = vmatpush1.msra.mxu0 %v361
    %411 = vmatprep.subr.mxu0 0.0
    %412 = vmatpush1.msra.mxu0 %v362
    %413 = vmatprep.subr.mxu0 0.0
    %414 = vmatpush1.msra.mxu0 %v363
    %415 = vmatprep.subr.mxu0 0.0
    %416 = vmatpush1.msra.mxu0 %v364
    %417 = vmatprep.subr.mxu0 0.0
    %418 = vmatpush1.msra.mxu0 %v365
    %419 = vmatprep.subr.mxu0 0.0
    %420 = vmatpush1.msra.mxu0 %v366
    %421 = vmatprep.subr.mxu0 0.0
    %422 = vmatpush1.msra.mxu0 %v367
    %423 = vmatprep.subr.mxu0 0.0
    %424 = vmatpush1.msra.mxu0 %v368
    %425 = vmatprep.subr.mxu0 0.0
    %426 = vmatpush1.msra.mxu0 %v369
    %427 = vmatprep.subr.mxu0 0.0
    %428 = vmatpush1.msra.mxu0 %v370
    %429 = vmatprep.subr.mxu0 0.0
    %430 = vmatpush1.msra.mxu0 %v371
    %431 = vmatprep.subr.mxu0 0.0
    %432 = vmatpush1.msra.mxu0 %v372
    %433 = vmatprep.subr.mxu0 0.0
    %434 = vmatpush1.msra.mxu0 %v373
    %435 = vmatprep.subr.mxu0 0.0
    %436 = vmatpush1.msra.mxu0 %v374
    %437 = vmatprep.subr.mxu0 0.0
    %438 = vmatpush1.msra.mxu0 %v375
    %439 = vmatprep.subr.mxu0 0.0
    %440 = vmatpush1.msra.mxu0 %v376
    %441 = vmatprep.subr.mxu0 0.0
    %442 = vmatpush1.msra.mxu0 %v377
    %443 = vmatprep.subr.mxu0 0.0
    %444 = vmatpush1.msra.mxu0 %v378
    %445 = vmatprep.subr.mxu0 0.0
    %446 = vmatpush1.msra.mxu0 %v379
    %447 = vmatprep.subr.mxu0 0.0
    %448 = vmatpush1.msra.mxu0 %v380
    %449 = vmatprep.subr.mxu0 0.0
    %450 = vmatpush1.msra.mxu0 %v381
    %451 = vmatprep.subr.mxu0 0.0
    %452 = vmatpush1.msra.mxu0 %v382
    %453 = vmatprep.subr.mxu0 0.0
    %454 = vmatpush1.msra.mxu0 %v383
    %455 = vmatprep.mubr.f32.mxu0 %v351
    %456 = vmatmul.mubr.f32.gmra.mrb[0].mxu0 %v350
    %v457 = vpop.f32.mrb[0].mxu0
    %v458 = vadd.f32 %v389, %v457
    %v459 = vpop.f32.mrb[0].mxu0
    %460 = vdwg.mxu0
    %461 = vst [vmem:[%s7] sm:$0xff] %v458
    // Predicated region
    $region42: #{simple_conv_only_net_forward.1} parent=1 // pred_check
      _
    $region43: #{simple_conv_only_net_forward.1} parent=1 // pred_check_branch
      %463 = sbr.rel (0) target = $region45
    $region44: #{simple_conv_only_net_forward.1} parent=1 // pred_region
      _
    $region45: #{simple_conv_only_net_forward.1} parent=1 // pred_fallthru
      _
    // Predicated region
    $region46: #{simple_conv_only_net_forward.1} parent=1 // pred_check
      _
    $region47: #{simple_conv_only_net_forward.1} parent=1 // pred_check_branch
      %465 = sbr.rel (0) target = $region49
    $region48: #{simple_conv_only_net_forward.1} parent=1 // pred_region
      _
    $region49: #{simple_conv_only_net_forward.1} parent=1 // pred_fallthru
      _
    %466 = vsyncpa [#allocation4], 1
    %467 = vsyncpa [#allocation6], 1

</llo_original>
